<compile_context>
chip_gen: v6e
topology: v6e:2x2x1
jax: 0.10.0
libtpu: 0.0.40
codegen_flags: <defaults>
</compile_context>

<pallas_src>
import functools

import jax
import jax.numpy as jnp
from jax.experimental import pallas as pl
from jax.experimental.pallas import tpu as pltpu


# ---------------------------------------------------------------------------
# In-kernel helpers
# ---------------------------------------------------------------------------

def _tile_sq_sum(pred_ref, target_ref, *, tm, total_rows, need_mask):
    """Partial sum of squared differences for the current (tm, lanes) tile -> (1,1) f32."""
    diff = pred_ref[...].astype(jnp.float32) - target_ref[...].astype(jnp.float32)
    sq = diff * diff
    if need_mask:  # static: only emitted when the last tile is ragged
        row_ids = pl.program_id(0) * tm + jax.lax.broadcasted_iota(
            jnp.int32, sq.shape, 0)
        sq = jnp.where(row_ids < total_rows, sq, 0.0)
    return jnp.sum(sq, keepdims=True)                       # (1, 1)


def _ce_mean(logits_ref, labels_ref, *, n_rows):
    """Mean cross-entropy (PyTorch nn.CrossEntropyLoss) with integer labels -> (1,1) f32."""
    logits = logits_ref[...].astype(jnp.float32)             # (N, C)
    m = jnp.max(logits, axis=-1, keepdims=True)
    lse = jnp.log(jnp.sum(jnp.exp(logits - m), axis=-1, keepdims=True)) + m   # (N, 1)
    col = jax.lax.broadcasted_iota(jnp.int32, logits.shape, 1)
    picked = jnp.sum(jnp.where(col == labels_ref[...], logits, 0.0),
                     axis=-1, keepdims=True)                  # (N, 1)
    return jnp.sum(lse - picked, keepdims=True) * (1.0 / float(n_rows))        # (1, 1)


# ---------------------------------------------------------------------------
# Kernels
# ---------------------------------------------------------------------------

def _fused_loss_kernel(pred_ref, target_ref, logits_ref, labels_ref, o_ref, acc_ref, *,
                       tm, total_rows, n_elems, n_cls_rows, ce_weight, need_mask):
    step = pl.program_id(0)

    @pl.when(step == 0)
    def _init():
        acc_ref[...] = jnp.zeros_like(acc_ref)

    acc_ref[...] += _tile_sq_sum(pred_ref, target_ref, tm=tm,
                                 total_rows=total_rows, need_mask=need_mask)

    @pl.when(step == pl.num_programs(0) - 1)
    def _finalize():
        mse = acc_ref[...] * (1.0 / float(n_elems))                     # (1, 1)
        ce = _ce_mean(logits_ref, labels_ref, n_rows=n_cls_rows)        # (1, 1)
        o_ref[...] = mse + float(ce_weight) * ce


def _mse_loss_kernel(pred_ref, target_ref, o_ref, acc_ref, *,
                     tm, total_rows, n_elems, need_mask):
    step = pl.program_id(0)

    @pl.when(step == 0)
    def _init():
        acc_ref[...] = jnp.zeros_like(acc_ref)

    acc_ref[...] += _tile_sq_sum(pred_ref, target_ref, tm=tm,
                                 total_rows=total_rows, need_mask=need_mask)

    @pl.when(step == pl.num_programs(0) - 1)
    def _finalize():
        o_ref[...] = acc_ref[...] * (1.0 / float(n_elems))


def _ce_loss_kernel(logits_ref, labels_ref, o_ref, *, n_rows):
    o_ref[...] = _ce_mean(logits_ref, labels_ref, n_rows=n_rows)


# ---------------------------------------------------------------------------
# Wrappers
# ---------------------------------------------------------------------------

def _flatten_nchw(x):
    n, k, h, w = x.shape
    # Lane-dense 2D slab: last dim H*W maps to lanes (256 here, a multiple of 128).
    return x.reshape(n * k, h * w)


def _mse_tiling(pred2d, tile_rows=None):
    rows, lanes = pred2d.shape
    itemsize = pred2d.dtype.itemsize
    if tile_rows is None:
        # ~4 MiB per input block -> 2 inputs x 2 pipeline buffers ~= 16 MiB of VMEM.
        budget = 4 * 1024 * 1024
        tm = max(8, (budget // max(1, lanes * itemsize)) // 8 * 8)
    else:
        tm = tile_rows
    if tm >= rows:
        tm = rows                      # single full-array block (no mask needed)
    num_tiles = pl.cdiv(rows, tm)
    need_mask = (rows % tm) != 0
    block_bytes = tm * lanes * itemsize
    vmem_limit = int(min(48 * 1024 * 1024,
                         max(16 * 1024 * 1024, 4 * block_bytes + (2 << 20))))
    return tm, num_tiles, need_mask, vmem_limit


def _fused_loss(heatmap_pred, heatmap_target, logits, labels, ce_weight):
    pred2d = _flatten_nchw(heatmap_pred)       # native dtype; cast happens in-kernel
    target2d = _flatten_nchw(heatmap_target)
    rows, lanes = pred2d.shape
    tm, num_tiles, need_mask, vmem_limit = _mse_tiling(pred2d)

    n, c = logits.shape
    labels2d = labels.astype(jnp.int32).reshape(n, 1)   # tiny; avoids (N,C) one-hot in HBM

    kernel = functools.partial(
        _fused_loss_kernel, tm=tm, total_rows=rows, n_elems=rows * lanes,
        n_cls_rows=n, ce_weight=ce_weight, need_mask=need_mask)

    out = pl.pallas_call(
        kernel,
        out_shape=jax.ShapeDtypeStruct((1, 1), jnp.float32),
        grid=(num_tiles,),
        in_specs=[
            pl.BlockSpec((tm, lanes), lambda i: (i, 0)),
            pl.BlockSpec((tm, lanes), lambda i: (i, 0)),
            pl.BlockSpec((n, c), lambda i: (0, 0)),    # resident across the grid
            pl.BlockSpec((n, 1), lambda i: (0, 0)),    # resident across the grid
        ],
        out_specs=pl.BlockSpec((1, 1), lambda i: (0, 0)),
        scratch_shapes=[pltpu.VMEM((1, 1), jnp.float32)],
        compiler_params=pltpu.CompilerParams(
            dimension_semantics=("arbitrary",),
            vmem_limit_bytes=vmem_limit),
    )(pred2d, target2d, logits, labels2d)
    return out[0, 0]


def _mse_loss(heatmap_pred, heatmap_target, tile_rows=None):
    pred2d = _flatten_nchw(heatmap_pred)
    target2d = _flatten_nchw(heatmap_target)
    rows, lanes = pred2d.shape
    tm, num_tiles, need_mask, vmem_limit = _mse_tiling(pred2d, tile_rows)

    kernel = functools.partial(
        _mse_loss_kernel, tm=tm, total_rows=rows, n_elems=rows * lanes,
        need_mask=need_mask)

    out = pl.pallas_call(
        kernel,
        out_shape=jax.ShapeDtypeStruct((1, 1), jnp.float32),
        grid=(num_tiles,),
        in_specs=[
            pl.BlockSpec((tm, lanes), lambda i: (i, 0)),
            pl.BlockSpec((tm, lanes), lambda i: (i, 0)),
        ],
        out_specs=pl.BlockSpec((1, 1), lambda i: (0, 0)),
        scratch_shapes=[pltpu.VMEM((1, 1), jnp.float32)],
        compiler_params=pltpu.CompilerParams(
            dimension_semantics=("arbitrary",),
            vmem_limit_bytes=vmem_limit),
    )(pred2d, target2d)
    return out[0, 0]


def _cross_entropy_loss(logits, labels):
    n, c = logits.shape
    labels2d = labels.astype(jnp.int32).reshape(n, 1)
    out = pl.pallas_call(
        functools.partial(_ce_loss_kernel, n_rows=n),
        out_shape=jax.ShapeDtypeStruct((1, 1), jnp.float32),
        in_specs=[pl.BlockSpec(memory_space=pltpu.VMEM),
                  pl.BlockSpec(memory_space=pltpu.VMEM)],
        out_specs=pl.BlockSpec(memory_space=pltpu.VMEM),
    )(logits, labels2d)
    return out[0, 0]


def multi_tasks_loss(heatmap_pred, label_pred, heatmap_target, label_target):
    """Mirrors MultiTasksLoss.forward (None handling is static Python control flow)."""
    if heatmap_pred is not None and label_pred is not None:
        # Fused single launch: MSE + 0.001 * CE.
        return _fused_loss(heatmap_pred, heatmap_target,
                           label_pred, label_target, ce_weight=0.001)
    elif heatmap_pred is not None:
        return _mse_loss(heatmap_pred, heatmap_target)
    else:
        return _cross_entropy_loss(label_pred, label_target)


# ---------------------------------------------------------------------------
# Main
# ---------------------------------------------------------------------------

if __name__ == "__main__":
    key = jax.random.PRNGKey(0)
    k1, k2, k3, k4 = jax.random.split(key, 4)

    N, K, H, W = 2, 4, 16, 16   # batch, num joints (heatmap channels), spatial
    C = 8                       # number of classes

    heatmap_pred = jax.random.normal(k1, (N, K, H, W), dtype=jnp.float32)
    heatmap_target = jax.random.normal(k2, (N, K, H, W), dtype=jnp.float32)
    label_pred = jax.random.normal(k3, (N, C), dtype=jnp.float32)
    label_target = jax.random.randint(k4, (N,), 0, C, dtype=jnp.int32)

    loss = jax.block_until_ready(
        multi_tasks_loss(heatmap_pred, label_pred, heatmap_target, label_target))

    # Pure-JAX reference check (same math as nn.MSELoss + nn.CrossEntropyLoss).
    mse_ref = jnp.mean((heatmap_pred - heatmap_target) ** 2)
    logz = jax.nn.logsumexp(label_pred, axis=-1)
    ce_ref = jnp.mean(logz - jnp.take_along_axis(
        label_pred, label_target[:, None], axis=-1)[:, 0])
    ref = mse_ref + 0.001 * ce_ref
    assert jnp.allclose(loss, ref, rtol=1e-5, atol=1e-5), (loss, ref)

    # Exercise the single-task branches as well.
    mse_only = jax.block_until_ready(
        multi_tasks_loss(heatmap_pred, None, heatmap_target, None))
    assert jnp.allclose(mse_only, mse_ref, rtol=1e-5, atol=1e-5), (mse_only, mse_ref)

    ce_only = jax.block_until_ready(
        multi_tasks_loss(None, label_pred, None, label_target))
    assert jnp.allclose(ce_only, ce_ref, rtol=1e-5, atol=1e-5), (ce_only, ce_ref)

    # Exercise the multi-tile masked-reduction path (grid > 1, ragged last tile).
    hp2 = jax.random.normal(k1, (2, 5, 16, 16), dtype=jnp.float32)
    ht2 = jax.random.normal(k2, (2, 5, 16, 16), dtype=jnp.float32)
    tiled = jax.block_until_ready(_mse_loss(hp2, ht2, tile_rows=8))
    tiled_ref = jnp.mean((hp2 - ht2) ** 2)
    assert jnp.allclose(tiled, tiled_ref, rtol=1e-5, atol=1e-5), (tiled, tiled_ref)

    print("KERNEL_OK")
</pallas_src>

<mosaic_0001>
module attributes {stable_mosaic.version = 11 : i64} {
  func.func @_fused_loss_kernel(%arg0: i32, %arg1: memref<8x256xf32, #tpu.memory_space<vmem>>, %arg2: memref<8x256xf32, #tpu.memory_space<vmem>>, %arg3: memref<2x8xf32, #tpu.memory_space<vmem>>, %arg4: memref<2x1xi32, #tpu.memory_space<vmem>>, %arg5: memref<1x1xf32, #tpu.memory_space<vmem>>, %arg6: memref<1x1xf32, #tpu.memory_space<vmem>>) attributes {dimension_semantics = [#tpu.dimension_semantics<arbitrary>], iteration_bounds = array<i64: 1>, scalar_prefetch = 0 : i64, scratch_operands = 1 : i64, tpu.core_type = #tpu.core_type<tc>, window_params = [{transform_indices = @transform_0, window_bounds = array<i64: 8, 256>}, {transform_indices = @transform_1, window_bounds = array<i64: 8, 256>}, {pipeline_mode = #tpu.pipeline_mode<synchronous>, transform_indices = @transform_2, window_bounds = array<i64: 2, 8>}, {pipeline_mode = #tpu.pipeline_mode<synchronous>, transform_indices = @transform_3, window_bounds = array<i64: 2, 1>}, {pipeline_mode = #tpu.pipeline_mode<synchronous>, transform_indices = @transform_4, window_bounds = array<i64: 1, 1>}]} {
    %c0_i32 = arith.constant 0 : i32
    %0 = arith.cmpi eq, %arg0, %c0_i32 : i32
    %1 = arith.extui %0 : i1 to i32
    %c0_i32_0 = arith.constant 0 : i32
    %2 = arith.cmpi ne, %1, %c0_i32_0 : i32
    scf.if %2 {
      %cst_10 = arith.constant 0.000000e+00 : f32
      %18 = vector.broadcast %cst_10 : f32 to vector<1x1xf32>
      %c0_11 = arith.constant 0 : index
      %c0_12 = arith.constant 0 : index
      %19 = vector.load %arg6[%c0_11, %c0_12] : memref<1x1xf32, #tpu.memory_space<vmem>>, vector<1x1xf32>
      tpu.vector_store %arg6[%c0_11, %c0_12], %18 {strides = array<i32>} : memref<1x1xf32, #tpu.memory_space<vmem>>, vector<1x1xf32>,
    } else {
    }
    %c0 = arith.constant 0 : index
    %c0_1 = arith.constant 0 : index
    %3 = vector.load %arg6[%c0, %c0_1] : memref<1x1xf32, #tpu.memory_space<vmem>>, vector<1x1xf32>
    %c0_2 = arith.constant 0 : index
    %c0_3 = arith.constant 0 : index
    %4 = vector.load %arg1[%c0_2, %c0_3] : memref<8x256xf32, #tpu.memory_space<vmem>>, vector<8x256xf32>
    %c0_4 = arith.constant 0 : index
    %c0_5 = arith.constant 0 : index
    %5 = vector.load %arg2[%c0_4, %c0_5] : memref<8x256xf32, #tpu.memory_space<vmem>>, vector<8x256xf32>
    %6 = arith.subf %4, %5 : vector<8x256xf32>
    %7 = arith.mulf %6, %6 : vector<8x256xf32>
    %8 = vector.shape_cast %7 : vector<8x256xf32> to vector<1x8x256xf32>
    %cst = arith.constant dense<0.000000e+00> : vector<1xf32>
    %9 = vector.multi_reduction <add>, %8, %cst [1, 2] : vector<1x8x256xf32> to vector<1xf32>
    %10 = vector.shape_cast %9 : vector<1xf32> to vector<1x1x1xf32>
    %11 = vector.extract %10[0, 0, 0] : f32 from vector<1x1x1xf32>
    %12 = vector.broadcast %11 : f32 to vector<1x1xf32>
    %13 = arith.addf %3, %12 : vector<1x1xf32>
    %c0_6 = arith.constant 0 : index
    %c0_7 = arith.constant 0 : index
    %14 = vector.load %arg6[%c0_6, %c0_7] : memref<1x1xf32, #tpu.memory_space<vmem>>, vector<1x1xf32>
    tpu.vector_store %arg6[%c0_6, %c0_7], %13 {strides = array<i32>} : memref<1x1xf32, #tpu.memory_space<vmem>>, vector<1x1xf32>,
    %c0_i32_8 = arith.constant 0 : i32
    %15 = arith.cmpi eq, %arg0, %c0_i32_8 : i32
    %16 = arith.extui %15 : i1 to i32
    %c0_i32_9 = arith.constant 0 : i32
    %17 = arith.cmpi ne, %16, %c0_i32_9 : i32
    scf.if %17 {
      %c0_10 = arith.constant 0 : index
      %c0_11 = arith.constant 0 : index
      %18 = vector.load %arg6[%c0_10, %c0_11] : memref<1x1xf32, #tpu.memory_space<vmem>>, vector<1x1xf32>
      %cst_12 = arith.constant 4.8828125E-4 : f32
      %19 = vector.broadcast %cst_12 : f32 to vector<1x1xf32>
      %20 = arith.mulf %18, %19 : vector<1x1xf32>
      %c0_13 = arith.constant 0 : index
      %c0_14 = arith.constant 0 : index
      %21 = vector.load %arg3[%c0_13, %c0_14] : memref<2x8xf32, #tpu.memory_space<vmem>>, vector<2x8xf32>
      %cst_15 = arith.constant dense<0xFF800000> : vector<2xf32>
      %22 = vector.multi_reduction <maximumf>, %21, %cst_15 [1] : vector<2x8xf32> to vector<2xf32>
      %23 = vector.shape_cast %22 : vector<2xf32> to vector<2x1xf32>
      %24 = vector.broadcast %23 : vector<2x1xf32> to vector<2x8xf32>
      %25 = arith.subf %21, %24 : vector<2x8xf32>
      %26 = math.exp %25 : vector<2x8xf32>
      %cst_16 = arith.constant dense<0.000000e+00> : vector<2xf32>
      %27 = vector.multi_reduction <add>, %26, %cst_16 [1] : vector<2x8xf32> to vector<2xf32>
      %28 = vector.shape_cast %27 : vector<2xf32> to vector<2x1xf32>
      %29 = math.log %28 : vector<2x1xf32>
      %30 = arith.addf %29, %23 : vector<2x1xf32>
      %31 = tpu.iota {dimensions = array<i32: 1>} : vector<2x8xi32>
      %c0_17 = arith.constant 0 : index
      %c0_18 = arith.constant 0 : index
      %32 = vector.load %arg4[%c0_17, %c0_18] : memref<2x1xi32, #tpu.memory_space<vmem>>, vector<2x1xi32>
      %33 = vector.broadcast %32 : vector<2x1xi32> to vector<2x8xi32>
      %34 = arith.cmpi eq, %31, %33 : vector<2x8xi32>
      %cst_19 = arith.constant 0.000000e+00 : f32
      %35 = vector.broadcast %cst_19 : f32 to vector<2x8xf32>
      %36 = arith.select %34, %21, %35 : vector<2x8xi1>, vector<2x8xf32>
      %cst_20 = arith.constant dense<0.000000e+00> : vector<2xf32>
      %37 = vector.multi_reduction <add>, %36, %cst_20 [1] : vector<2x8xf32> to vector<2xf32>
      %38 = vector.shape_cast %37 : vector<2xf32> to vector<2x1xf32>
      %39 = arith.subf %30, %38 : vector<2x1xf32>
      %40 = vector.shape_cast %39 : vector<2x1xf32> to vector<1x2x1xf32>
      %cst_21 = arith.constant dense<0.000000e+00> : vector<1xf32>
      %41 = vector.multi_reduction <add>, %40, %cst_21 [1, 2] : vector<1x2x1xf32> to vector<1xf32>
      %42 = vector.shape_cast %41 : vector<1xf32> to vector<1x1x1xf32>
      %43 = vector.extract %42[0, 0, 0] : f32 from vector<1x1x1xf32>
      %44 = vector.broadcast %43 : f32 to vector<1x1xf32>
      %cst_22 = arith.constant 5.000000e-01 : f32
      %45 = vector.broadcast %cst_22 : f32 to vector<1x1xf32>
      %46 = arith.mulf %44, %45 : vector<1x1xf32>
      %cst_23 = arith.constant 1.000000e-03 : f32
      %47 = vector.broadcast %cst_23 : f32 to vector<1x1xf32>
      %48 = arith.mulf %47, %46 : vector<1x1xf32>
      %49 = arith.addf %20, %48 : vector<1x1xf32>
      %c0_24 = arith.constant 0 : index
      %c0_25 = arith.constant 0 : index
      %50 = vector.load %arg5[%c0_24, %c0_25] : memref<1x1xf32, #tpu.memory_space<vmem>>, vector<1x1xf32>
      tpu.vector_store %arg5[%c0_24, %c0_25], %49 {strides = array<i32>} : memref<1x1xf32, #tpu.memory_space<vmem>>, vector<1x1xf32>,
    } else {
    }
    return
  }
  func.func @transform_0(%arg0: i32) -> (i32, i32) {
    %c0_i32 = arith.constant 0 : i32
    %c0_i32_0 = arith.constant 0 : i32
    return %arg0, %c0_i32 : i32, i32
  }
  func.func @transform_1(%arg0: i32) -> (i32, i32) {
    %c0_i32 = arith.constant 0 : i32
    %c0_i32_0 = arith.constant 0 : i32
    return %arg0, %c0_i32 : i32, i32
  }
  func.func @transform_2(%arg0: i32) -> (i32, i32) {
    %c0_i32 = arith.constant 0 : i32
    %c0_i32_0 = arith.constant 0 : i32
    %c0_i32_1 = arith.constant 0 : i32
    return %c0_i32, %c0_i32_0 : i32, i32
  }
  func.func @transform_3(%arg0: i32) -> (i32, i32) {
    %c0_i32 = arith.constant 0 : i32
    %c0_i32_0 = arith.constant 0 : i32
    %c0_i32_1 = arith.constant 0 : i32
    return %c0_i32, %c0_i32_0 : i32, i32
  }
  func.func @transform_4(%arg0: i32) -> (i32, i32) {
    %c0_i32 = arith.constant 0 : i32
    %c0_i32_0 = arith.constant 0 : i32
    %c0_i32_1 = arith.constant 0 : i32
    return %c0_i32, %c0_i32_0 : i32, i32
  }
}

</mosaic_0001>

<llo_original>
// kernel: tpu_custom_call.1
$region0: #{tpu_custom_call.1}
  #allocation0 [shape = 'u32[]', space=smem, size = 0x4, offset = 0x4, fixed_abs, tag = 'smem constant byte address 0x4 - core index']
  #allocation1 [shape = 'u32[144,128]{1,0:T(1,128)}', space=vmem, size = 0x12000, scoped, tag = 'internal scratch']
  #allocation2 [shape = 'f32[1,1]{1,0:T(1,128)}', space=vmem, size = 0x200, scoped, tag = 'scratch operand']
  %s0 = inlined_call_operand.hbm [shape: f32[8,256], index: 0, kind: input, shape index: {}]
  %s1 = inlined_call_operand.hbm [shape: f32[8,256], index: 1, kind: input, shape index: {}]
  %s2 = inlined_call_operand.vmem [shape: f32[2,8], index: 2, kind: input, shape index: {}]
  %s3 = inlined_call_operand.vmem [shape: s32[2,1], index: 3, kind: input, shape index: {}]
  %s4 = inlined_call_operand.hbm [shape: f32[1,1], index: 4, kind: output, shape index: {}]
  %s5 = sld [smem:[#allocation0]]
  $region42: #{tpu_custom_call.1} parent=0
    _
  %s7 = ssub.s32 1, %s5
  %s8 = scalar_select 0, %s7, %s5
  $region1: #{tpu_custom_call.1} parent=0
    #allocation3 [shape = 'u8[8192]{0}', space=vmem, size = 0x2000, scoped, tag = 'input window, operand 0, single buffered']
    #allocation4 [shape = 's32[1]{0}', space=sflag, size = 0x4, scoped, tag = 'scoped memory for tpu_custom_call.1']
    #allocation5 [shape = 's32[1]{0}', space=sflag, size = 0x4, scoped, tag = 'scoped memory for tpu_custom_call.1']
    #allocation6 [shape = 'u8[8192]{0}', space=vmem, size = 0x2000, scoped, tag = 'input window, operand 1, single buffered']
    #allocation7 [shape = 's32[1]{0}', space=sflag, size = 0x4, scoped, tag = 'scoped memory for tpu_custom_call.1']
    #allocation8 [shape = 'u8[512]{0}', space=vmem, size = 0x400, scoped, tag = 'output window, operand 0, single buffered']
    %9 = vsyncpa [#allocation4], 0
    %10 = vsyncpa [#allocation7], 0
    %11 = vsyncpa [#allocation5], 0
    // Predicated region
    $region2: #{tpu_custom_call.1} parent=1 // pred_check
      _
    $region3: #{tpu_custom_call.1} parent=1 // pred_check_branch
      %13 = sbr.rel (0) target = $region5
    $region4: #{tpu_custom_call.1} parent=1 // pred_region
      %s15 = ssub.s32 256, 256
      %16 = vsyncadd [#allocation4], %s15
      %s18 = sshll.u32 [#allocation3], 4
      %s19 = int_to_ptr.vmem [resolvable:$true] %s18
      %21 = dma.hbm_to_vmem [thread:$0]  %s0, 256, %s19, [#allocation4]
    $region5: #{tpu_custom_call.1} parent=1 // pred_fallthru
      _
    // Predicated region
    $region6: #{tpu_custom_call.1} parent=1 // pred_check
      _
    $region7: #{tpu_custom_call.1} parent=1 // pred_check_branch
      %23 = sbr.rel (0) target = $region9
    $region8: #{tpu_custom_call.1} parent=1 // pred_region
      %s25 = ssub.s32 256, 256
      %26 = vsyncadd [#allocation7], %s25
      %s28 = sshll.u32 [#allocation6], 4
      %s29 = int_to_ptr.vmem [resolvable:$true] %s28
      %31 = dma.hbm_to_vmem [thread:$0]  %s1, 256, %s29, [#allocation7]
    $region9: #{tpu_custom_call.1} parent=1 // pred_fallthru
      _
    // Predicated region
    $region10: #{tpu_custom_call.1} parent=1 // pred_check
      _
    $region11: #{tpu_custom_call.1} parent=1 // pred_check_branch
      %33 = sbr.rel (0) target = $region13
    $region12: #{tpu_custom_call.1} parent=1 // pred_region
      _
    $region13: #{tpu_custom_call.1} parent=1 // pred_fallthru
      _
    // Predicated region
    $region14: #{tpu_custom_call.1} parent=1 // pred_check
      _
    $region15: #{tpu_custom_call.1} parent=1 // pred_check_branch
      %35 = sbr.rel (0) target = $region17
    $region16: #{tpu_custom_call.1} parent=1 // pred_region
      _
    $region17: #{tpu_custom_call.1} parent=1 // pred_fallthru
      _
    // Predicated region
    $region18: #{tpu_custom_call.1} parent=1 // pred_check
      _
    $region19: #{tpu_custom_call.1} parent=1 // pred_check_branch
      %37 = sbr.rel (0) target = $region21
    $region20: #{tpu_custom_call.1} parent=1 // pred_region
      %38 = dma.done [#allocation4], 256
    $region21: #{tpu_custom_call.1} parent=1 // pred_fallthru
      _
    // Predicated region
    $region22: #{tpu_custom_call.1} parent=1 // pred_check
      _
    $region23: #{tpu_custom_call.1} parent=1 // pred_check_branch
      %40 = sbr.rel (0) target = $region25
    $region24: #{tpu_custom_call.1} parent=1 // pred_region
      %41 = dma.done [#allocation7], 256
    $region25: #{tpu_custom_call.1} parent=1 // pred_fallthru
      _
    %p42 = scmp.eq.s32.totalorder 0, 0
    // Predicated region
    $region26: #{tpu_custom_call.1} parent=1 // pred_check
      %p43 = pneg %p42
    $region27: #{tpu_custom_call.1} parent=1 // pred_check_branch
      %45 = sbr.rel (%p43) target = $region29
    $region28: #{tpu_custom_call.1} parent=1 // pred_region
      %vm46 = vcmask 0
      %47 = vst.msk [vmem:[#allocation2] sm:$0x1] %vm46, 0.0
    $region29: #{tpu_custom_call.1} parent=1 // pred_fallthru
      _
    %v48 = vld [vmem:[#allocation2] sm:$0x1]
    %v49 = vld [vmem:[#allocation3] sm:$0xff]
    %v50 = vld [vmem:[#allocation3 + $0x8] sm:$0xff]
    %v51 = vld [vmem:[#allocation6] sm:$0xff]
    %v52 = vld [vmem:[#allocation6 + $0x8] sm:$0xff]
    %v53 = vsub.f32 %v49, %v51
    %v54 = vsub.f32 %v50, %v52
    %v55 = vmul.f32 %v53, %v53
    %v56 = vmul.f32 %v54, %v54
    %v57 = vadd.f32 %v55, %v56
    %58 = vadd.xlane.f32.xlu0 %v57
    %v59 = vpop.xlane.xlu0 %58
    %v60 = vrot.slane %v59, 4
    %v61 = vadd.f32 %v59, %v60
    %v62 = vrot.slane %v61, 2
    %v63 = vadd.f32 %v61, %v62
    %v64 = vrot.slane %v63, 1
    %v65 = vadd.f32 %v63, %v64
    %s66 = vtos %v65
    %v67 = vstv %s66
    %v68 = vadd.f32 %v48, %v67
    %vm69 = vcmask 0
    %70 = vst.msk [vmem:[#allocation2] sm:$0x1] %vm69, %v68
    // Predicated region
    $region30: #{tpu_custom_call.1} parent=1 // pred_check
      %p71 = pneg %p42
    $region31: #{tpu_custom_call.1} parent=1 // pred_check_branch
      %73 = sbr.rel (%p71) target = $region33
    $region32: #{tpu_custom_call.1} parent=1 // pred_region
      %v74 = vld [vmem:[#allocation2] sm:$0x1]
      %v75 = vmul.f32 %v74, 0.00048828125
      %v76 = vld [vmem:[%s2] sm:$0x3]
      %vm77 = vcmask 58368
      %v78 = vsel %vm77, %v76, -inf
      %79 = vmax.xlane.f32.xlu0 %v78
      %v80 = vpop.xlane.xlu0 %79
      %v81 = vsub.f32 %v76, %v80
      %v82 = vmul.f32 %v81, 1.442695
      %v83 = vpow.pop %v82
      %v84 = vsel %vm77, %v83, 0.0
      %85 = vadd.xlane.f32.xlu0 %v84
      %v86 = vpop.xlane.xlu0 %85
      %v87 = vlog2.pop %v86
      %v88 = vmul.f32 %v87, 0.6931472
      %v89 = vadd.f32 %v88, %v80
      %v90 = vlaneseq
      %v91 = vand.u32 %v90, 127
      %v92 = vld [vmem:[%s3] sm:$0x3]
      %93 = vset.pattern.permute.xlu0 0
      %94 = vperm.xlu0 %93, %v92
      %v95 = vpop.permute.xlu0 %94
      %vm96 = vcmp.eq.s32.totalorder %v91, %v95
      %v97 = vsel %vm96, %v76, 0.0
      %v98 = vsel %vm77, %v97, 0.0
      %99 = vadd.xlane.f32.xlu0 %v98
      %v100 = vpop.xlane.xlu0 %99
      %v101 = vsub.f32 %v89, %v100
      %vm102 = vcmask 1024
      %v103 = vsel %vm102, %v101, 0.0
      %104 = vadd.xlane.f32.xlu0 %v103
      %v105 = vpop.xlane.xlu0 %104
      %v106 = vrot.slane %v105, 4
      %v107 = vadd.f32 %v105, %v106
      %v108 = vrot.slane %v107, 2
      %v109 = vadd.f32 %v107, %v108
      %v110 = vrot.slane %v109, 1
      %v111 = vadd.f32 %v109, %v110
      %s112 = vtos %v111
      %v113 = vstv %s112
      %v114 = vmul.f32 %v113, 0.5
      %v115 = vmul.f32 %v114, 0.001
      %v116 = vadd.f32 %v75, %v115
      %117 = vst.msk [vmem:[#allocation8] sm:$0x1] %vm69, %v116
    $region33: #{tpu_custom_call.1} parent=1 // pred_fallthru
      _
    // Predicated region
    $region34: #{tpu_custom_call.1} parent=1 // pred_check
      _
    $region35: #{tpu_custom_call.1} parent=1 // pred_check_branch
      %119 = sbr.rel (0) target = $region37
    $region36: #{tpu_custom_call.1} parent=1 // pred_region
      %s121 = ssub.s32 16, 16
      %122 = vsyncadd [#allocation5], %s121
      %s124 = sshll.u32 [#allocation8], 4
      %s125 = int_to_ptr.vmem [resolvable:$true] %s124
      %127 = dma.vmem_to_hbm [thread:$0]  %s125, 16, %s4, [#allocation5]
    $region37: #{tpu_custom_call.1} parent=1 // pred_fallthru
      _
    // Predicated region
    $region38: #{tpu_custom_call.1} parent=1 // pred_check
      _
    $region39: #{tpu_custom_call.1} parent=1 // pred_check_branch
      %129 = sbr.rel (0) target = $region41
    $region40: #{tpu_custom_call.1} parent=1 // pred_region
      %130 = dma.done [#allocation5], 16
    $region41: #{tpu_custom_call.1} parent=1 // pred_fallthru
      _
    %131 = vsyncpa [#allocation4], 1
    %132 = vsyncpa [#allocation7], 1
    %133 = vsyncpa [#allocation5], 1

</llo_original>
